<compile_context>
chip_gen: v5e
topology: v5e:2x2
jax: 0.10.0
libtpu: 0.0.40
codegen_flags: <defaults>
</compile_context>

<pallas_src>
import functools

import numpy as np
import jax
import jax.numpy as jnp
from jax import lax
from jax.experimental import pallas as pl
from jax.experimental.pallas import tpu as pltpu


def _vpm_kernel(tile_hi_ref,               # SMEM (num_batch_tiles,) i32 (scalar prefetch)
                geo_ref,                   # VMEM (6, TB, TN) f32 [unit dir xyz, origin xyz]
                tgt_ref,                   # VMEM (6, TB, 1)  f32 [unit tgt dir xyz, tgt origin xyz]
                cnt_ref,                   # VMEM (TB, 1)     i32 per-row #candidates
                out_ref,                   # VMEM (4, TB, 128) f32 [score, d, local_idx, n_in]
                best_sc, d2_sc, idx_sc, nin_sc,   # VMEM (TB, 1) f32 accumulators
                *, radius, kpt, tn):
    s = pl.program_id(0)          # candidate split (parallel; feeds v7x's 2nd TC)
    i = pl.program_id(1)          # batch tile (parallel)
    k = pl.program_id(2)          # candidate tile within split ('arbitrary' reduction)
    tb = cnt_ref.shape[0]

    @pl.when(k == 0)
    def _init():
        best_sc[...] = jnp.full((tb, 1), jnp.finfo(jnp.float32).min, jnp.float32)
        d2_sc[...] = jnp.zeros((tb, 1), jnp.float32)
        idx_sc[...] = jnp.zeros((tb, 1), jnp.float32)
        nin_sc[...] = jnp.zeros((tb, 1), jnp.float32)

    off = (s * kpt + k) * tn      # first global candidate handled by this tile

    # Skip candidate tiles that are entirely padding for every row of this
    # batch tile (tile_hi = max valid-candidate count over the TB rows).
    @pl.when(off < tile_hi_ref[i])
    def _compute():
        cnt = cnt_ref[...]                                              # (TB, 1) i32
        iota = lax.broadcasted_iota(jnp.int32, (tb, tn), 1)
        valid = (off + iota) < cnt                                      # (TB, TN)

        # Directions are pre-normalized on the host, so cos == dot product:
        # no rsqrt / extra multiplies on the hot path (v7x is VPU/EUP bound).
        cos = jnp.clip(geo_ref[0] * tgt_ref[0] + geo_ref[1] * tgt_ref[1]
                       + geo_ref[2] * tgt_ref[2], -1.0, 1.0)

        ex = geo_ref[3] - tgt_ref[3]
        ey = geo_ref[4] - tgt_ref[4]
        ez = geo_ref[5] - tgt_ref[5]
        d2 = ex * ex + ey * ey + ez * ez                                # squared distance

        # d^2 <= r^2 instead of sqrt-then-compare; can only differ for a
        # candidate exactly on the radius boundary (1-ulp effect).
        in_radius = jnp.logical_and(d2 <= radius * radius, valid)

        # Lexicographic selection key: argmin(angle) == argmax(cos), and
        # in-radius candidates always beat out-of-radius ones (torch sets
        # t=10000 for the latter whenever any in-radius candidate exists).
        #   in-radius        -> cos            (in [-1, 1], stored EXACTLY)
        #   valid, outside   -> cos - 4.0      (in [-5, -3])
        #   padding          -> -8.0
        score = jnp.where(in_radius, cos, cos - 4.0)
        score = jnp.where(valid, score, jnp.float32(-8.0))

        tile_best = jnp.max(score, axis=1, keepdims=True)
        tile_idx = jnp.min(jnp.where(score == tile_best, iota, jnp.int32(tn)),
                           axis=1, keepdims=True)        # first max (torch argmin)
        onehot = iota == tile_idx
        tile_d2 = jnp.sum(jnp.where(onehot, d2, 0.0), axis=1, keepdims=True)
        tile_nin = jnp.sum(in_radius.astype(jnp.float32), axis=1, keepdims=True)

        take = tile_best > best_sc[...]       # strict ">" keeps earlier-tile ties
        best_sc[...] = jnp.where(take, tile_best, best_sc[...])
        d2_sc[...] = jnp.where(take, tile_d2, d2_sc[...])
        idx_sc[...] = jnp.where(take, (off + tile_idx).astype(jnp.float32), idx_sc[...])
        nin_sc[...] = nin_sc[...] + tile_nin

    @pl.when(k == pl.num_programs(2) - 1)
    def _finalize():
        out_ref[0] = jnp.broadcast_to(best_sc[...], (tb, 128))
        # Single deferred sqrt on the selected (TB,1) value, not TB*TN sqrts/tile.
        out_ref[1] = jnp.broadcast_to(jnp.sqrt(d2_sc[...]), (tb, 128))
        out_ref[2] = jnp.broadcast_to(idx_sc[...], (tb, 128))
        out_ref[3] = jnp.broadcast_to(nin_sc[...], (tb, 128))


@functools.partial(jax.jit, static_argnames=("radius", "tb", "tn", "n_splits"))
def _vpm_call(tile_hi, geo, tgt, counts, *, radius, tb, tn, n_splits):
    _, b_pad, n_pad = geo.shape
    batch_tiles = b_pad // tb
    kpt = n_pad // (tn * n_splits)          # candidate tiles per split
    grid = (n_splits, batch_tiles, kpt)

    out = pl.pallas_call(
        functools.partial(_vpm_kernel, radius=radius, kpt=kpt, tn=tn),
        out_shape=jax.ShapeDtypeStruct((4 * n_splits, b_pad, 128), jnp.float32),
        grid_spec=pltpu.PrefetchScalarGridSpec(
            num_scalar_prefetch=1,
            grid=grid,
            in_specs=[
                pl.BlockSpec((6, tb, tn), lambda s, i, k, th: (0, i, s * kpt + k)),  # geo
                pl.BlockSpec((6, tb, 1), lambda s, i, k, th: (0, i, 0)),             # tgt
                pl.BlockSpec((tb, 1), lambda s, i, k, th: (i, 0)),                   # counts
            ],
            out_specs=pl.BlockSpec((4, tb, 128), lambda s, i, k, th: (s, i, 0)),
            scratch_shapes=[
                pltpu.VMEM((tb, 1), jnp.float32),   # running best score
                pltpu.VMEM((tb, 1), jnp.float32),   # running best squared distance
                pltpu.VMEM((tb, 1), jnp.float32),   # running best local index
                pltpu.VMEM((tb, 1), jnp.float32),   # running num-in-radius
            ],
        ),
        compiler_params=pltpu.CompilerParams(
            dimension_semantics=("parallel", "parallel", "arbitrary"),
            vmem_limit_bytes=32 * 1024 * 1024),
    )(tile_hi, geo, tgt, counts)

    # Merge the per-split partial results in plain JAX (cheap: O(n_splits * B)).
    parts = out[:, :, 0].reshape(n_splits, 4, b_pad)    # [score, d, idx, nin] per split
    if n_splits == 1:
        sel = parts[0]
    else:
        pick1 = parts[1, 0, :] > parts[0, 0, :]         # strict: ties -> earlier split
        sel = jnp.where(pick1[None, :], parts[1], parts[0])
    score_sel = sel[0]
    d_sel = sel[1]
    lidx = sel[2].astype(jnp.int32)
    nin = jnp.sum(parts[:, 3, :], axis=0).astype(jnp.int32)
    # Rows whose winner is outside the radius stored cos - 4; undo it.
    cos_sel = jnp.where(score_sel < jnp.float32(-2.0), score_sel + 4.0, score_sel)
    return cos_sel, d_sel, lidx, nin


class NaiveViewpointMatchingPallas:
    """JAX/Pallas port of NaiveViewpointMatching (forward only)."""

    def __init__(self, reference_data, radius=0.8):
        self.all_rotations = reference_data['scene_rotations']
        self.all_object_ids = reference_data['scene_object_ids']
        self.all_translations = reference_data['scene_translations']
        self.radius = float(radius)
        self._cache = {}   # (scene_ids, object_ids) -> packed device-resident candidates

    def _pack_candidates(self, scene_ids, object_ids, batch):
        # TODO(synk): the per-scene python-dict lookup and ragged "object_in_frames"
        # gather has no clean on-device equivalent; it stays host-side, but the packed
        # result is cached per (scene_ids, object_ids) so repeat calls skip the repack
        # and the H2D upload of the large arrays.
        cand_dir, cand_tr, cand_fr = [], [], []
        for b in range(batch):
            sid, oid = scene_ids[b], object_ids[b]
            r_all = np.vstack(self.all_rotations[sid]).astype(np.float32).reshape(-1, 3, 3)
            t_all = np.vstack(self.all_translations[sid]).astype(np.float32).reshape(-1, 3)
            frames = list(self.all_object_ids[str(sid)][oid])
            if len(frames) == 0:
                frames = list(range(r_all.shape[0]))     # "impossible match" fallback
            d = r_all[frames][:, :, 2]                   # viewing direction = R @ [0,0,1]
            d = d / np.linalg.norm(d, axis=1, keepdims=True)   # pre-normalized on host
            cand_dir.append(d.astype(np.float32))
            cand_tr.append(t_all[frames])
            cand_fr.append(np.asarray(frames, dtype=np.int64))

        # Tile sizes: batch tile 8..32 (multiple of 8), candidate tile <= 4096 lanes.
        # Per-step DMA = 6 planes * tb * tn * 4B (~3 MiB at 32x4096); ~6.3 MiB
        # double-buffered fits every generation's scoped-VMEM default.
        tb = int(min(32, 8 * int(np.ceil(batch / 8.0))))
        b_pad = tb * int(np.ceil(batch / float(tb)))
        n_max = max(f.shape[0] for f in cand_fr)
        n_pad128 = 128 * int(np.ceil(n_max / 128.0))
        tn_target = 4096
        if n_pad128 <= tn_target:
            tn = n_pad128
            kt = 1
        else:
            tn = tn_target
            kt = int(np.ceil(n_max / float(tn)))
        # v7x has 2 TensorCores; with a single 'parallel' batch tile, split the
        # candidate reduction into 2 parallel halves so the second core gets work.
        n_splits = 2 if (b_pad // tb == 1 and kt >= 2) else 1
        if n_splits == 2 and kt % 2 == 1:
            kt += 1
        n_pad = kt * tn

        geo = np.zeros((6, b_pad, n_pad), np.float32)
        counts = np.zeros((b_pad, 1), np.int32)
        for b in range(batch):
            n = cand_fr[b].shape[0]
            geo[0:3, b, :n] = cand_dir[b].T              # unit viewing directions
            geo[3:6, b, :n] = cand_tr[b].T               # camera origins
            counts[b, 0] = n
        tile_hi = counts[:, 0].reshape(b_pad // tb, tb).max(axis=1).astype(np.int32)

        return dict(geo=jnp.asarray(geo), counts=jnp.asarray(counts),
                    tile_hi=jnp.asarray(tile_hi), cand_fr=cand_fr,
                    tb=tb, tn=tn, n_splits=n_splits, b_pad=b_pad)

    def forward(self, in_data):
        scene_ids = in_data['scene_id']
        object_ids = in_data['object_id']
        poses = np.asarray(in_data['transformation'], dtype=np.float32)  # (B, 4, 4)
        batch = len(object_ids)

        key = (tuple(str(s) for s in scene_ids), tuple(int(o) for o in object_ids))
        packed = self._cache.get(key)
        if packed is None:
            packed = self._pack_candidates(scene_ids, object_ids, batch)
            self._cache[key] = packed

        b_pad = packed['b_pad']
        tgt = np.zeros((6, b_pad, 1), np.float32)
        tdir = poses[:, :3, 2]
        tdir = tdir / np.linalg.norm(tdir, axis=1, keepdims=True)
        tgt[0:3, :batch, 0] = tdir.T                     # unit target viewing direction
        tgt[3:6, :batch, 0] = poses[:, :3, 3].T          # target origin

        cos_sel, d_sel, lidx, nrad = jax.block_until_ready(
            _vpm_call(packed['tile_hi'], packed['geo'], jnp.asarray(tgt), packed['counts'],
                      radius=self.radius, tb=packed['tb'], tn=packed['tn'],
                      n_splits=packed['n_splits']))

        cos_np = np.clip(np.asarray(cos_sel)[:batch], -1.0, 1.0)
        ang = np.arccos(cos_np)                          # trivial glue on B scalars
        d_np = np.asarray(d_sel)[:batch]
        lidx_np = np.asarray(lidx)[:batch]
        nrad_np = np.asarray(nrad)[:batch]
        cand_fr = packed['cand_fr']
        frame_idx = [int(cand_fr[b][int(lidx_np[b])]) for b in range(batch)]

        out = dict(in_data)
        out.update({
            'rotation': [poses[b, :3, :3] for b in range(batch)],
            'frame_idx': frame_idx,
            'angle_distance': [float(x) for x in ang],
            'center_distance': [float(x) for x in d_np],
            'num_in_radius': [int(x) for x in nrad_np],
        })
        return out


def _numpy_reference(reference_data, in_data, radius=0.8):
    """Literal numpy transcription of the torch forward, for validation."""
    poses = np.asarray(in_data['transformation'], dtype=np.float32)
    res = {'frame_idx': [], 'angle_distance': [], 'center_distance': [], 'num_in_radius': []}
    for b in range(len(in_data['object_id'])):
        sid, oid = in_data['scene_id'][b], in_data['object_id'][b]
        r_all = np.vstack(reference_data['scene_rotations'][sid]).astype(np.float32).reshape(-1, 3, 3)
        t_all = np.vstack(reference_data['scene_translations'][sid]).astype(np.float32).reshape(-1, 3)
        frames = list(reference_data['scene_object_ids'][str(sid)][oid])
        if len(frames) == 0:
            frames = list(range(r_all.shape[0]))
        rv, tv = r_all[frames], t_all[frames]
        tgt_r, tgt_o = poses[b, :3, :3], poses[b, :3, 3]
        tdir = tgt_r[:, 2]
        dirs = rv[:, :, 2]
        cos = np.clip(dirs @ tdir / (np.linalg.norm(dirs, axis=1) * np.linalg.norm(tdir)), -1.0, 1.0)
        t = np.arccos(cos)
        d = np.linalg.norm(tv - tgt_o[None, :], axis=1)
        in_r = np.where(d <= radius)[0]
        if len(in_r) > 0:
            keep = np.zeros(len(t), bool)
            keep[in_r] = True
            t = np.where(keep, t, 10000.0)
            d = np.where(keep, d, 10000.0)
        sel = int(np.argmin(t))
        res['frame_idx'].append(frames[sel])
        res['angle_distance'].append(float(t[sel]))
        res['center_distance'].append(float(d[sel]))
        res['num_in_radius'].append(len(in_r))
    return res


if __name__ == "__main__":
    key = jax.random.PRNGKey(0)
    k_rot, k_tr, k_prot, k_porg = jax.random.split(key, 4)

    num_scenes, frames_per_scene, num_objects = 2, 20, 3

    raw_r = np.asarray(jax.random.normal(k_rot, (num_scenes, frames_per_scene, 3, 3)),
                       dtype=np.float32)
    raw_t = np.asarray(jax.random.normal(k_tr, (num_scenes, frames_per_scene, 3)),
                       dtype=np.float32) * 0.6

    scene_rotations, scene_translations, scene_object_ids = {}, {}, {}
    for s in range(num_scenes):
        rots = []
        for f in range(frames_per_scene):
            q, _ = np.linalg.qr(raw_r[s, f])
            rots.append(q.astype(np.float32))
        scene_rotations[s] = rots
        scene_translations[s] = [raw_t[s, f] for f in range(frames_per_scene)]
        # object o is visible in a deterministic, ragged subset of frames
        scene_object_ids[str(s)] = [
            list(range(o, frames_per_scene - 2 * o, num_objects)) for o in range(num_objects)
        ]

    reference_data = {'scene_rotations': scene_rotations,
                      'scene_translations': scene_translations,
                      'scene_object_ids': scene_object_ids}

    batch = 2
    poses = np.zeros((batch, 4, 4), np.float32)
    praw = np.asarray(jax.random.normal(k_prot, (batch, 3, 3)), dtype=np.float32)
    porg = np.asarray(jax.random.normal(k_porg, (batch, 3)), dtype=np.float32) * 0.3
    for b in range(batch):
        q, _ = np.linalg.qr(praw[b])
        poses[b, :3, :3] = q
        poses[b, :3, 3] = porg[b]
        poses[b, 3, 3] = 1.0

    in_data = {
        'scene_id': [0, 1],
        'object_id': [1, 2],
        'ann_id': [0, 1],
        'token': ['tok0', 'tok1'],
        'description': ['desc0', 'desc1'],
        'transformation': poses,
        'quaternion': np.zeros((batch, 4), np.float32),
        'translation': poses[:, :3, 3],
    }

    module = NaiveViewpointMatchingPallas(reference_data, radius=0.8)
    out = module.forward(in_data)
    out = module.forward(in_data)   # second call exercises the device-tensor cache

    ref = _numpy_reference(reference_data, in_data, radius=0.8)
    assert out['frame_idx'] == ref['frame_idx'], (out['frame_idx'], ref['frame_idx'])
    assert out['num_in_radius'] == ref['num_in_radius'], (out['num_in_radius'], ref['num_in_radius'])
    np.testing.assert_allclose(out['angle_distance'], ref['angle_distance'], rtol=1e-3, atol=1e-3)
    np.testing.assert_allclose(out['center_distance'], ref['center_distance'], rtol=1e-3, atol=1e-3)

    print("KERNEL_OK")
</pallas_src>

<mosaic_0001>
module attributes {stable_mosaic.version = 11 : i64} {
  func.func @_vpm_kernel(%arg0: i32, %arg1: i32, %arg2: i32, %arg3: memref<1xi32, #tpu.memory_space<smem>>, %arg4: memref<6x8x128xf32, #tpu.memory_space<vmem>>, %arg5: memref<6x8x1xf32, #tpu.memory_space<vmem>>, %arg6: memref<8x1xi32, #tpu.memory_space<vmem>>, %arg7: memref<4x8x128xf32, #tpu.memory_space<vmem>>, %arg8: memref<8x1xf32, #tpu.memory_space<vmem>>, %arg9: memref<8x1xf32, #tpu.memory_space<vmem>>, %arg10: memref<8x1xf32, #tpu.memory_space<vmem>>, %arg11: memref<8x1xf32, #tpu.memory_space<vmem>>) attributes {dimension_semantics = [#tpu.dimension_semantics<parallel>, #tpu.dimension_semantics<parallel>, #tpu.dimension_semantics<arbitrary>], iteration_bounds = array<i64: 1, 1, 1>, scalar_prefetch = 1 : i64, scratch_operands = 4 : i64, tpu.core_type = #tpu.core_type<tc>, window_params = [{transform_indices = @transform_0, window_bounds = array<i64: 6, 8, 128>}, {transform_indices = @transform_1, window_bounds = array<i64: 6, 8, 1>}, {transform_indices = @transform_2, window_bounds = array<i64: 8, 1>}, {transform_indices = @transform_3, window_bounds = array<i64: 4, 8, 128>}]} {
    %c0_i32 = arith.constant 0 : i32
    %0 = arith.cmpi eq, %arg2, %c0_i32 : i32
    %1 = arith.extui %0 : i1 to i32
    %c0_i32_0 = arith.constant 0 : i32
    %2 = arith.cmpi ne, %1, %c0_i32_0 : i32
    scf.if %2 {
      %cst = arith.constant -3.40282347E+38 : f32
      %14 = vector.broadcast %cst : f32 to vector<8x1xf32>
      %c0 = arith.constant 0 : index
      %c0_4 = arith.constant 0 : index
      %15 = vector.load %arg8[%c0, %c0_4] : memref<8x1xf32, #tpu.memory_space<vmem>>, vector<8x1xf32>
      tpu.vector_store %arg8[%c0, %c0_4], %14 {strides = array<i32>} : memref<8x1xf32, #tpu.memory_space<vmem>>, vector<8x1xf32>,
      %cst_5 = arith.constant 0.000000e+00 : f32
      %16 = vector.broadcast %cst_5 : f32 to vector<8x1xf32>
      %c0_6 = arith.constant 0 : index
      %c0_7 = arith.constant 0 : index
      %17 = vector.load %arg9[%c0_6, %c0_7] : memref<8x1xf32, #tpu.memory_space<vmem>>, vector<8x1xf32>
      tpu.vector_store %arg9[%c0_6, %c0_7], %16 {strides = array<i32>} : memref<8x1xf32, #tpu.memory_space<vmem>>, vector<8x1xf32>,
      %cst_8 = arith.constant 0.000000e+00 : f32
      %18 = vector.broadcast %cst_8 : f32 to vector<8x1xf32>
      %c0_9 = arith.constant 0 : index
      %c0_10 = arith.constant 0 : index
      %19 = vector.load %arg10[%c0_9, %c0_10] : memref<8x1xf32, #tpu.memory_space<vmem>>, vector<8x1xf32>
      tpu.vector_store %arg10[%c0_9, %c0_10], %18 {strides = array<i32>} : memref<8x1xf32, #tpu.memory_space<vmem>>, vector<8x1xf32>,
      %cst_11 = arith.constant 0.000000e+00 : f32
      %20 = vector.broadcast %cst_11 : f32 to vector<8x1xf32>
      %c0_12 = arith.constant 0 : index
      %c0_13 = arith.constant 0 : index
      %21 = vector.load %arg11[%c0_12, %c0_13] : memref<8x1xf32, #tpu.memory_space<vmem>>, vector<8x1xf32>
      tpu.vector_store %arg11[%c0_12, %c0_13], %20 {strides = array<i32>} : memref<8x1xf32, #tpu.memory_space<vmem>>, vector<8x1xf32>,
    } else {
    }
    %c1_i32 = arith.constant 1 : i32
    %3 = arith.muli %arg0, %c1_i32 : i32
    %4 = arith.addi %3, %arg2 : i32
    %c128_i32 = arith.constant 128 : i32
    %5 = arith.muli %4, %c128_i32 : i32
    %6 = arith.index_cast %arg1 : i32 to index
    %7 = memref.load %arg3[%6] : memref<1xi32, #tpu.memory_space<smem>>
    %8 = arith.cmpi slt, %5, %7 : i32
    %9 = arith.extui %8 : i1 to i32
    %c0_i32_1 = arith.constant 0 : i32
    %10 = arith.cmpi ne, %9, %c0_i32_1 : i32
    scf.if %10 {
      %c0 = arith.constant 0 : index
      %c0_4 = arith.constant 0 : index
      %14 = vector.load %arg6[%c0, %c0_4] : memref<8x1xi32, #tpu.memory_space<vmem>>, vector<8x1xi32>
      %15 = tpu.iota {dimensions = array<i32: 1>} : vector<8x128xi32>
      %16 = vector.broadcast %5 : i32 to vector<8x128xi32>
      %17 = arith.addi %16, %15 : vector<8x128xi32>
      %18 = vector.broadcast %14 : vector<8x1xi32> to vector<8x128xi32>
      %19 = arith.cmpi slt, %17, %18 : vector<8x128xi32>
      %c0_5 = arith.constant 0 : index
      %c0_6 = arith.constant 0 : index
      %c0_7 = arith.constant 0 : index
      %20 = vector.load %arg4[%c0_5, %c0_6, %c0_7] : memref<6x8x128xf32, #tpu.memory_space<vmem>>, vector<1x8x128xf32>
      %21 = vector.shape_cast %20 : vector<1x8x128xf32> to vector<8x128xf32>
      %c0_8 = arith.constant 0 : index
      %c0_9 = arith.constant 0 : index
      %c0_10 = arith.constant 0 : index
      %22 = vector.load %arg5[%c0_8, %c0_9, %c0_10] : memref<6x8x1xf32, #tpu.memory_space<vmem>>, vector<1x8x1xf32>
      %23 = vector.shape_cast %22 : vector<1x8x1xf32> to vector<8x1xf32>
      %24 = vector.broadcast %23 : vector<8x1xf32> to vector<8x128xf32>
      %25 = arith.mulf %21, %24 : vector<8x128xf32>
      %c1 = arith.constant 1 : index
      %c0_11 = arith.constant 0 : index
      %c0_12 = arith.constant 0 : index
      %26 = vector.load %arg4[%c1, %c0_11, %c0_12] : memref<6x8x128xf32, #tpu.memory_space<vmem>>, vector<1x8x128xf32>
      %27 = vector.shape_cast %26 : vector<1x8x128xf32> to vector<8x128xf32>
      %c1_13 = arith.constant 1 : index
      %c0_14 = arith.constant 0 : index
      %c0_15 = arith.constant 0 : index
      %28 = vector.load %arg5[%c1_13, %c0_14, %c0_15] : memref<6x8x1xf32, #tpu.memory_space<vmem>>, vector<1x8x1xf32>
      %29 = vector.shape_cast %28 : vector<1x8x1xf32> to vector<8x1xf32>
      %30 = vector.broadcast %29 : vector<8x1xf32> to vector<8x128xf32>
      %31 = arith.mulf %27, %30 : vector<8x128xf32>
      %32 = arith.addf %25, %31 : vector<8x128xf32>
      %c2 = arith.constant 2 : index
      %c0_16 = arith.constant 0 : index
      %c0_17 = arith.constant 0 : index
      %33 = vector.load %arg4[%c2, %c0_16, %c0_17] : memref<6x8x128xf32, #tpu.memory_space<vmem>>, vector<1x8x128xf32>
      %34 = vector.shape_cast %33 : vector<1x8x128xf32> to vector<8x128xf32>
      %c2_18 = arith.constant 2 : index
      %c0_19 = arith.constant 0 : index
      %c0_20 = arith.constant 0 : index
      %35 = vector.load %arg5[%c2_18, %c0_19, %c0_20] : memref<6x8x1xf32, #tpu.memory_space<vmem>>, vector<1x8x1xf32>
      %36 = vector.shape_cast %35 : vector<1x8x1xf32> to vector<8x1xf32>
      %37 = vector.broadcast %36 : vector<8x1xf32> to vector<8x128xf32>
      %38 = arith.mulf %34, %37 : vector<8x128xf32>
      %39 = arith.addf %32, %38 : vector<8x128xf32>
      %cst = arith.constant -1.000000e+00 : f32
      %cst_21 = arith.constant 1.000000e+00 : f32
      %40 = vector.broadcast %cst : f32 to vector<8x128xf32>
      %41 = arith.maximumf %40, %39 : vector<8x128xf32>
      %42 = vector.broadcast %cst_21 : f32 to vector<8x128xf32>
      %43 = arith.minimumf %42, %41 : vector<8x128xf32>
      %c3 = arith.constant 3 : index
      %c0_22 = arith.constant 0 : index
      %c0_23 = arith.constant 0 : index
      %44 = vector.load %arg4[%c3, %c0_22, %c0_23] : memref<6x8x128xf32, #tpu.memory_space<vmem>>, vector<1x8x128xf32>
      %45 = vector.shape_cast %44 : vector<1x8x128xf32> to vector<8x128xf32>
      %c3_24 = arith.constant 3 : index
      %c0_25 = arith.constant 0 : index
      %c0_26 = arith.constant 0 : index
      %46 = vector.load %arg5[%c3_24, %c0_25, %c0_26] : memref<6x8x1xf32, #tpu.memory_space<vmem>>, vector<1x8x1xf32>
      %47 = vector.shape_cast %46 : vector<1x8x1xf32> to vector<8x1xf32>
      %48 = vector.broadcast %47 : vector<8x1xf32> to vector<8x128xf32>
      %49 = arith.subf %45, %48 : vector<8x128xf32>
      %c4 = arith.constant 4 : index
      %c0_27 = arith.constant 0 : index
      %c0_28 = arith.constant 0 : index
      %50 = vector.load %arg4[%c4, %c0_27, %c0_28] : memref<6x8x128xf32, #tpu.memory_space<vmem>>, vector<1x8x128xf32>
      %51 = vector.shape_cast %50 : vector<1x8x128xf32> to vector<8x128xf32>
      %c4_29 = arith.constant 4 : index
      %c0_30 = arith.constant 0 : index
      %c0_31 = arith.constant 0 : index
      %52 = vector.load %arg5[%c4_29, %c0_30, %c0_31] : memref<6x8x1xf32, #tpu.memory_space<vmem>>, vector<1x8x1xf32>
      %53 = vector.shape_cast %52 : vector<1x8x1xf32> to vector<8x1xf32>
      %54 = vector.broadcast %53 : vector<8x1xf32> to vector<8x128xf32>
      %55 = arith.subf %51, %54 : vector<8x128xf32>
      %c5 = arith.constant 5 : index
      %c0_32 = arith.constant 0 : index
      %c0_33 = arith.constant 0 : index
      %56 = vector.load %arg4[%c5, %c0_32, %c0_33] : memref<6x8x128xf32, #tpu.memory_space<vmem>>, vector<1x8x128xf32>
      %57 = vector.shape_cast %56 : vector<1x8x128xf32> to vector<8x128xf32>
      %c5_34 = arith.constant 5 : index
      %c0_35 = arith.constant 0 : index
      %c0_36 = arith.constant 0 : index
      %58 = vector.load %arg5[%c5_34, %c0_35, %c0_36] : memref<6x8x1xf32, #tpu.memory_space<vmem>>, vector<1x8x1xf32>
      %59 = vector.shape_cast %58 : vector<1x8x1xf32> to vector<8x1xf32>
      %60 = vector.broadcast %59 : vector<8x1xf32> to vector<8x128xf32>
      %61 = arith.subf %57, %60 : vector<8x128xf32>
      %62 = arith.mulf %49, %49 : vector<8x128xf32>
      %63 = arith.mulf %55, %55 : vector<8x128xf32>
      %64 = arith.addf %62, %63 : vector<8x128xf32>
      %65 = arith.mulf %61, %61 : vector<8x128xf32>
      %66 = arith.addf %64, %65 : vector<8x128xf32>
      %cst_37 = arith.constant 6.400000e-01 : f32
      %67 = vector.broadcast %cst_37 : f32 to vector<8x128xf32>
      %68 = arith.cmpf ole, %66, %67 : vector<8x128xf32>
      %69 = arith.andi %68, %19 : vector<8x128xi1>
      %cst_38 = arith.constant 4.000000e+00 : f32
      %70 = vector.broadcast %cst_38 : f32 to vector<8x128xf32>
      %71 = arith.subf %43, %70 : vector<8x128xf32>
      %72 = arith.select %69, %43, %71 : vector<8x128xi1>, vector<8x128xf32>
      %cst_39 = arith.constant -8.000000e+00 : f32
      %73 = vector.broadcast %cst_39 : f32 to vector<8x128xf32>
      %74 = arith.select %19, %72, %73 : vector<8x128xi1>, vector<8x128xf32>
      %cst_40 = arith.constant dense<0xFF800000> : vector<8xf32>
      %75 = vector.multi_reduction <maximumf>, %74, %cst_40 [1] : vector<8x128xf32> to vector<8xf32>
      %76 = vector.shape_cast %75 : vector<8xf32> to vector<8x1xf32>
      %77 = vector.broadcast %76 : vector<8x1xf32> to vector<8x128xf32>
      %78 = arith.cmpf oeq, %74, %77 : vector<8x128xf32>
      %c128_i32_41 = arith.constant 128 : i32
      %79 = vector.broadcast %c128_i32_41 : i32 to vector<8x128xi32>
      %80 = arith.select %78, %15, %79 : vector<8x128xi1>, vector<8x128xi32>
      %cst_42 = arith.constant dense<2147483647> : vector<8xi32>
      %81 = vector.multi_reduction <minsi>, %80, %cst_42 [1] : vector<8x128xi32> to vector<8xi32>
      %82 = vector.shape_cast %81 : vector<8xi32> to vector<8x1xi32>
      %83 = vector.broadcast %82 : vector<8x1xi32> to vector<8x128xi32>
      %84 = arith.cmpi eq, %15, %83 : vector<8x128xi32>
      %cst_43 = arith.constant 0.000000e+00 : f32
      %85 = vector.broadcast %cst_43 : f32 to vector<8x128xf32>
      %86 = arith.select %84, %66, %85 : vector<8x128xi1>, vector<8x128xf32>
      %cst_44 = arith.constant dense<0.000000e+00> : vector<8xf32>
      %87 = vector.multi_reduction <add>, %86, %cst_44 [1] : vector<8x128xf32> to vector<8xf32>
      %88 = vector.shape_cast %87 : vector<8xf32> to vector<8x1xf32>
      %89 = arith.extui %69 : vector<8x128xi1> to vector<8x128xi32>
      %90 = arith.sitofp %89 : vector<8x128xi32> to vector<8x128xf32>
      %cst_45 = arith.constant dense<0.000000e+00> : vector<8xf32>
      %91 = vector.multi_reduction <add>, %90, %cst_45 [1] : vector<8x128xf32> to vector<8xf32>
      %92 = vector.shape_cast %91 : vector<8xf32> to vector<8x1xf32>
      %c0_46 = arith.constant 0 : index
      %c0_47 = arith.constant 0 : index
      %93 = vector.load %arg8[%c0_46, %c0_47] : memref<8x1xf32, #tpu.memory_space<vmem>>, vector<8x1xf32>
      %94 = arith.cmpf ogt, %76, %93 : vector<8x1xf32>
      %c0_48 = arith.constant 0 : index
      %c0_49 = arith.constant 0 : index
      %95 = vector.load %arg8[%c0_48, %c0_49] : memref<8x1xf32, #tpu.memory_space<vmem>>, vector<8x1xf32>
      %96 = arith.select %94, %76, %95 : vector<8x1xi1>, vector<8x1xf32>
      %c0_50 = arith.constant 0 : index
      %c0_51 = arith.constant 0 : index
      %97 = vector.load %arg8[%c0_50, %c0_51] : memref<8x1xf32, #tpu.memory_space<vmem>>, vector<8x1xf32>
      tpu.vector_store %arg8[%c0_50, %c0_51], %96 {strides = array<i32>} : memref<8x1xf32, #tpu.memory_space<vmem>>, vector<8x1xf32>,
      %c0_52 = arith.constant 0 : index
      %c0_53 = arith.constant 0 : index
      %98 = vector.load %arg9[%c0_52, %c0_53] : memref<8x1xf32, #tpu.memory_space<vmem>>, vector<8x1xf32>
      %99 = arith.select %94, %88, %98 : vector<8x1xi1>, vector<8x1xf32>
      %c0_54 = arith.constant 0 : index
      %c0_55 = arith.constant 0 : index
      %100 = vector.load %arg9[%c0_54, %c0_55] : memref<8x1xf32, #tpu.memory_space<vmem>>, vector<8x1xf32>
      tpu.vector_store %arg9[%c0_54, %c0_55], %99 {strides = array<i32>} : memref<8x1xf32, #tpu.memory_space<vmem>>, vector<8x1xf32>,
      %101 = vector.broadcast %5 : i32 to vector<8x1xi32>
      %102 = arith.addi %101, %82 : vector<8x1xi32>
      %103 = arith.sitofp %102 : vector<8x1xi32> to vector<8x1xf32>
      %c0_56 = arith.constant 0 : index
      %c0_57 = arith.constant 0 : index
      %104 = vector.load %arg10[%c0_56, %c0_57] : memref<8x1xf32, #tpu.memory_space<vmem>>, vector<8x1xf32>
      %105 = arith.select %94, %103, %104 : vector<8x1xi1>, vector<8x1xf32>
      %c0_58 = arith.constant 0 : index
      %c0_59 = arith.constant 0 : index
      %106 = vector.load %arg10[%c0_58, %c0_59] : memref<8x1xf32, #tpu.memory_space<vmem>>, vector<8x1xf32>
      tpu.vector_store %arg10[%c0_58, %c0_59], %105 {strides = array<i32>} : memref<8x1xf32, #tpu.memory_space<vmem>>, vector<8x1xf32>,
      %c0_60 = arith.constant 0 : index
      %c0_61 = arith.constant 0 : index
      %107 = vector.load %arg11[%c0_60, %c0_61] : memref<8x1xf32, #tpu.memory_space<vmem>>, vector<8x1xf32>
      %108 = arith.addf %107, %92 : vector<8x1xf32>
      %c0_62 = arith.constant 0 : index
      %c0_63 = arith.constant 0 : index
      %109 = vector.load %arg11[%c0_62, %c0_63] : memref<8x1xf32, #tpu.memory_space<vmem>>, vector<8x1xf32>
      tpu.vector_store %arg11[%c0_62, %c0_63], %108 {strides = array<i32>} : memref<8x1xf32, #tpu.memory_space<vmem>>, vector<8x1xf32>,
    } else {
    }
    %c0_i32_2 = arith.constant 0 : i32
    %11 = arith.cmpi eq, %arg2, %c0_i32_2 : i32
    %12 = arith.extui %11 : i1 to i32
    %c0_i32_3 = arith.constant 0 : i32
    %13 = arith.cmpi ne, %12, %c0_i32_3 : i32
    scf.if %13 {
      %c0 = arith.constant 0 : index
      %c0_4 = arith.constant 0 : index
      %14 = vector.load %arg8[%c0, %c0_4] : memref<8x1xf32, #tpu.memory_space<vmem>>, vector<8x1xf32>
      %15 = vector.shape_cast %14 : vector<8x1xf32> to vector<8x1xf32>
      %16 = vector.broadcast %15 : vector<8x1xf32> to vector<8x128xf32>
      %c0_5 = arith.constant 0 : index
      %c0_6 = arith.constant 0 : index
      %c0_7 = arith.constant 0 : index
      %17 = vector.load %arg7[%c0_5, %c0_6, %c0_7] : memref<4x8x128xf32, #tpu.memory_space<vmem>>, vector<1x8x128xf32>
      %18 = vector.shape_cast %17 : vector<1x8x128xf32> to vector<8x128xf32>
      %19 = vector.shape_cast %16 : vector<8x128xf32> to vector<1x8x128xf32>
      tpu.vector_store %arg7[%c0_5, %c0_6, %c0_7], %19 {strides = array<i32>} : memref<4x8x128xf32, #tpu.memory_space<vmem>>, vector<1x8x128xf32>,
      %c0_8 = arith.constant 0 : index
      %c0_9 = arith.constant 0 : index
      %20 = vector.load %arg9[%c0_8, %c0_9] : memref<8x1xf32, #tpu.memory_space<vmem>>, vector<8x1xf32>
      %21 = math.sqrt %20 : vector<8x1xf32>
      %22 = vector.shape_cast %21 : vector<8x1xf32> to vector<8x1xf32>
      %23 = vector.broadcast %22 : vector<8x1xf32> to vector<8x128xf32>
      %c1 = arith.constant 1 : index
      %c0_10 = arith.constant 0 : index
      %c0_11 = arith.constant 0 : index
      %24 = vector.load %arg7[%c1, %c0_10, %c0_11] : memref<4x8x128xf32, #tpu.memory_space<vmem>>, vector<1x8x128xf32>
      %25 = vector.shape_cast %24 : vector<1x8x128xf32> to vector<8x128xf32>
      %26 = vector.shape_cast %23 : vector<8x128xf32> to vector<1x8x128xf32>
      tpu.vector_store %arg7[%c1, %c0_10, %c0_11], %26 {strides = array<i32>} : memref<4x8x128xf32, #tpu.memory_space<vmem>>, vector<1x8x128xf32>,
      %c0_12 = arith.constant 0 : index
      %c0_13 = arith.constant 0 : index
      %27 = vector.load %arg10[%c0_12, %c0_13] : memref<8x1xf32, #tpu.memory_space<vmem>>, vector<8x1xf32>
      %28 = vector.shape_cast %27 : vector<8x1xf32> to vector<8x1xf32>
      %29 = vector.broadcast %28 : vector<8x1xf32> to vector<8x128xf32>
      %c2 = arith.constant 2 : index
      %c0_14 = arith.constant 0 : index
      %c0_15 = arith.constant 0 : index
      %30 = vector.load %arg7[%c2, %c0_14, %c0_15] : memref<4x8x128xf32, #tpu.memory_space<vmem>>, vector<1x8x128xf32>
      %31 = vector.shape_cast %30 : vector<1x8x128xf32> to vector<8x128xf32>
      %32 = vector.shape_cast %29 : vector<8x128xf32> to vector<1x8x128xf32>
      tpu.vector_store %arg7[%c2, %c0_14, %c0_15], %32 {strides = array<i32>} : memref<4x8x128xf32, #tpu.memory_space<vmem>>, vector<1x8x128xf32>,
      %c0_16 = arith.constant 0 : index
      %c0_17 = arith.constant 0 : index
      %33 = vector.load %arg11[%c0_16, %c0_17] : memref<8x1xf32, #tpu.memory_space<vmem>>, vector<8x1xf32>
      %34 = vector.shape_cast %33 : vector<8x1xf32> to vector<8x1xf32>
      %35 = vector.broadcast %34 : vector<8x1xf32> to vector<8x128xf32>
      %c3 = arith.constant 3 : index
      %c0_18 = arith.constant 0 : index
      %c0_19 = arith.constant 0 : index
      %36 = vector.load %arg7[%c3, %c0_18, %c0_19] : memref<4x8x128xf32, #tpu.memory_space<vmem>>, vector<1x8x128xf32>
      %37 = vector.shape_cast %36 : vector<1x8x128xf32> to vector<8x128xf32>
      %38 = vector.shape_cast %35 : vector<8x128xf32> to vector<1x8x128xf32>
      tpu.vector_store %arg7[%c3, %c0_18, %c0_19], %38 {strides = array<i32>} : memref<4x8x128xf32, #tpu.memory_space<vmem>>, vector<1x8x128xf32>,
    } else {
    }
    return
  }
  func.func @transform_0(%arg0: i32, %arg1: i32, %arg2: i32, %arg3: memref<1xi32, #tpu.memory_space<smem>>) -> (i32, i32, i32) {
    %c1_i32 = arith.constant 1 : i32
    %0 = arith.muli %arg0, %c1_i32 : i32
    %1 = arith.addi %0, %arg2 : i32
    %c0_i32 = arith.constant 0 : i32
    %c0_i32_0 = arith.constant 0 : i32
    return %c0_i32, %arg1, %1 : i32, i32, i32
  }
  func.func @transform_1(%arg0: i32, %arg1: i32, %arg2: i32, %arg3: memref<1xi32, #tpu.memory_space<smem>>) -> (i32, i32, i32) {
    %c0_i32 = arith.constant 0 : i32
    %c0_i32_0 = arith.constant 0 : i32
    %c0_i32_1 = arith.constant 0 : i32
    return %c0_i32, %arg1, %c0_i32_0 : i32, i32, i32
  }
  func.func @transform_2(%arg0: i32, %arg1: i32, %arg2: i32, %arg3: memref<1xi32, #tpu.memory_space<smem>>) -> (i32, i32) {
    %c0_i32 = arith.constant 0 : i32
    %c0_i32_0 = arith.constant 0 : i32
    return %arg1, %c0_i32 : i32, i32
  }
  func.func @transform_3(%arg0: i32, %arg1: i32, %arg2: i32, %arg3: memref<1xi32, #tpu.memory_space<smem>>) -> (i32, i32, i32) {
    %c0_i32 = arith.constant 0 : i32
    %c0_i32_0 = arith.constant 0 : i32
    return %arg0, %arg1, %c0_i32 : i32, i32, i32
  }
}

</mosaic_0001>

<llo_original>
// kernel: _vpm_call.1
$region0: #{_vpm_call.1}
  #allocation0 [shape = 'u32[]', space=smem, size = 0x4, offset = 0x4, fixed_abs, tag = 'smem constant byte address 0x4 - core index']
  #allocation1 [shape = 'u32[72,128]{1,0:T(1,128)}', space=vmem, size = 0x9000, scoped, tag = 'internal scratch']
  #allocation2 [shape = 'f32[8,1]{1,0:T(8,128)}', space=vmem, size = 0x1000, scoped, tag = 'scratch operand']
  #allocation3 [shape = 'f32[8,1]{1,0:T(8,128)}', space=vmem, size = 0x1000, scoped, tag = 'scratch operand']
  #allocation4 [shape = 'f32[8,1]{1,0:T(8,128)}', space=vmem, size = 0x1000, scoped, tag = 'scratch operand']
  #allocation5 [shape = 'f32[8,1]{1,0:T(8,128)}', space=vmem, size = 0x1000, scoped, tag = 'scratch operand']
  #allocation6 [shape = 's32[1]{0}', space=sflag, size = 0x4, scoped, tag = 'scoped memory for _vpm_call.1']
  #allocation7 [shape = 's32[1]{0:T(128)S(6)}', space=smem, size = 0x200, scoped, tag = 'prefetched SMEM operand 0']
  %s0 = inlined_call_operand.<no memory space> [shape: s32[1], index: 0, kind: input, shape index: {}]
  %s1 = inlined_call_operand.vmem [shape: f32[6,8,128], index: 1, kind: input, shape index: {}]
  %s2 = inlined_call_operand.vmem [shape: f32[6,8,1], index: 2, kind: input, shape index: {}]
  %s3 = inlined_call_operand.vmem [shape: s32[8,1], index: 3, kind: input, shape index: {}]
  %s4 = inlined_call_operand.vmem [shape: f32[4,8,128], index: 4, kind: output, shape index: {}]
  %s5 = sld [smem:[#allocation0]]
  $region34: #{_vpm_call.1} parent=0
    _
  %s7 = ssub.s32 1, %s5
  %s8 = scalar_select 0, %s7, %s5
  %9 = sst [smem:[#allocation7]] %s0
  // Predicated region
  $region2: #{_vpm_call.1} parent=0 // pred_check
    _
  $region3: #{_vpm_call.1} parent=0 // pred_check_branch
    %11 = sbr.rel (0) target = $region5
  $region4: #{_vpm_call.1} parent=0 // pred_region
    %s12 = sadd.s32 0, 0
    %p13 = scmp.lt.s32.totalorder %s12, 0
    %s14 = scalar_select %p13, %s12, 0
    %s15 = smul.addr %s14, 8
    %s16 = scalar_lea.vmem %s1, %s15
    %s17 = sadd.s32 0, 0
  $region5: #{_vpm_call.1} parent=0 // pred_fallthru
    _
  // Predicated region
  $region6: #{_vpm_call.1} parent=0 // pred_check
    _
  $region7: #{_vpm_call.1} parent=0 // pred_check_branch
    %19 = sbr.rel (0) target = $region9
  $region8: #{_vpm_call.1} parent=0 // pred_region
    _
  $region9: #{_vpm_call.1} parent=0 // pred_fallthru
    _
  // Predicated region
  $region10: #{_vpm_call.1} parent=0 // pred_check
    _
  $region11: #{_vpm_call.1} parent=0 // pred_check_branch
    %21 = sbr.rel (0) target = $region13
  $region12: #{_vpm_call.1} parent=0 // pred_region
    _
  $region13: #{_vpm_call.1} parent=0 // pred_fallthru
    _
  %s22 = sadd.s32 0, 0
  %p23 = scmp.lt.s32.totalorder %s22, 0
  %s24 = scalar_select %p23, %s22, 0
  %s25 = smul.addr %s24, 8
  %s26 = scalar_lea.vmem %s1, %s25
  %s27 = sadd.s32 0, 0
  %p28 = scmp.lt.s32.totalorder %s27, 0
  %s29 = scalar_select %p28, %s27, 0
  %s30 = smul.addr %s29, 8
  %s31 = scalar_lea.vmem %s1, %s30
  %s32 = sadd.s32 0, 0
  %p33 = scmp.eq.s32.totalorder 0, 0
  // Predicated region
  $region14: #{_vpm_call.1} parent=0 // pred_check
    %p34 = pneg %p33
  $region15: #{_vpm_call.1} parent=0 // pred_check_branch
    %36 = sbr.rel (%p34) target = $region17
  $region16: #{_vpm_call.1} parent=0 // pred_region
    %vm37 = vcmask 7168
    %38 = vst.msk [vmem:[#allocation2] sm:$0xff] %vm37, -3.4028235e+38
    %39 = vst.msk [vmem:[#allocation3] sm:$0xff] %vm37, 0.0
    %40 = vst.msk [vmem:[#allocation4] sm:$0xff] %vm37, 0.0
    %41 = vst.msk [vmem:[#allocation5] sm:$0xff] %vm37, 0.0
  $region17: #{_vpm_call.1} parent=0 // pred_fallthru
    _
  %s42 = sadd.s32 0, 0
  %s43 = smul.u32 %s42, 128
  %s44 = sld [smem:[#allocation7]]
  %p45 = scmp.lt.s32.totalorder %s43, %s44
  // Predicated region
  $region18: #{_vpm_call.1} parent=0 // pred_check
    %p46 = pneg %p45
  $region19: #{_vpm_call.1} parent=0 // pred_check_branch
    %48 = sbr.rel (%p46) target = $region21
  $region20: #{_vpm_call.1} parent=0 // pred_region
    %v49 = vld [vmem:[%s3] sm:$0xff]
    %v50 = vlaneseq
    %v51 = vand.u32 %v50, 127
    %v52 = vstv %s43
    %v53 = vadd.s32 %v52, %v51
    %54 = vset.pattern.permute.xlu0 0
    %55 = vperm.xlu0 %54, %v49
    %v56 = vpop.permute.xlu0 %55
    %vm57 = vcmp.lt.s32.totalorder %v53, %v56
    %v58 = vld [vmem:[%s31] sm:$0xff]
    %v59 = vld [vmem:[%s2] sm:$0xff]
    %61 = vset.pattern.permute.xlu0 0
    %62 = vperm.xlu0 %61, %v59
    %v63 = vpop.permute.xlu0 %62
    %v65 = vmul.f32 %v58, %v63
    %s66 = scalar_lea.vmem %s31, 8
    %v67 = vld [vmem:[%s66] sm:$0xff]
    %s68 = scalar_lea.vmem %s2, 8
    %v69 = vld [vmem:[%s68] sm:$0xff]
    %71 = vset.pattern.permute.xlu0 0
    %72 = vperm.xlu0 %71, %v69
    %v73 = vpop.permute.xlu0 %72
    %v75 = vmul.f32 %v67, %v73
    %v76 = vadd.f32 %v65, %v75
    %s77 = scalar_lea.vmem %s31, 16
    %v78 = vld [vmem:[%s77] sm:$0xff]
    %s79 = scalar_lea.vmem %s2, 16
    %v80 = vld [vmem:[%s79] sm:$0xff]
    %82 = vset.pattern.permute.xlu0 0
    %83 = vperm.xlu0 %82, %v80
    %v84 = vpop.permute.xlu0 %83
    %v86 = vmul.f32 %v78, %v84
    %v87 = vadd.f32 %v76, %v86
    %v88 = vmax.f32 %v87, -1.0
    %v89 = vmin.f32 %v88, 1.0
    %s90 = scalar_lea.vmem %s31, 24
    %v91 = vld [vmem:[%s90] sm:$0xff]
    %s92 = scalar_lea.vmem %s2, 24
    %v93 = vld [vmem:[%s92] sm:$0xff]
    %95 = vset.pattern.permute.xlu0 0
    %96 = vperm.xlu0 %95, %v93
    %v97 = vpop.permute.xlu0 %96
    %v99 = vsub.f32 %v91, %v97
    %s100 = scalar_lea.vmem %s31, 32
    %v101 = vld [vmem:[%s100] sm:$0xff]
    %s102 = scalar_lea.vmem %s2, 32
    %v103 = vld [vmem:[%s102] sm:$0xff]
    %105 = vset.pattern.permute.xlu0 0
    %106 = vperm.xlu0 %105, %v103
    %v107 = vpop.permute.xlu0 %106
    %v109 = vsub.f32 %v101, %v107
    %s110 = scalar_lea.vmem %s31, 40
    %v111 = vld [vmem:[%s110] sm:$0xff]
    %s112 = scalar_lea.vmem %s2, 40
    %v113 = vld [vmem:[%s112] sm:$0xff]
    %115 = vset.pattern.permute.xlu0 0
    %116 = vperm.xlu0 %115, %v113
    %v117 = vpop.permute.xlu0 %116
    %v119 = vsub.f32 %v111, %v117
    %v120 = vmul.f32 %v99, %v99
    %v121 = vmul.f32 %v109, %v109
    %v122 = vadd.f32 %v120, %v121
    %v123 = vmul.f32 %v119, %v119
    %v124 = vadd.f32 %v122, %v123
    %vm125 = vcmp.le.f32.partialorder %v124, 0.64
    %vm126 = vmand %vm125, %vm57
    %v127 = vsub.f32 %v89, 4.0
    %v128 = vsel %vm126, %v89, %v127
    %v129 = vsel %vm57, %v128, -8.0
    %130 = vmax.xlane.f32.xlu0 %v129
    %v131 = vpop.xlane.xlu0 %130
    %vm132 = vcmp.eq.f32.partialorder %v129, %v131
    %v133 = vsel %vm132, %v51, 128
    %v134 = vand.u32 %v133, 65535
    %v135 = vshra.s32 %v133, 16
    %v136 = vcvt.s32.f32 %v134
    %v137 = vcvt.s32.f32 %v135
    %138 = vmin.xlane.f32.xlu0 %v137
    %v139 = vpop.xlane.xlu0 %138
    %vm140 = vcmp.eq.f32.partialorder %v137, %v139
    %v141 = vsel %vm140, %v136, inf
    %142 = vmin.xlane.f32.xlu0 %v141
    %v143 = vpop.xlane.xlu0 %142
    %v144 = vcvt.f32.s32 %v143
    %v145 = vcvt.f32.s32 %v139
    %v146 = vshll.u32 %v145, 16
    %v147 = vadd.s32 %v146, %v144
    %vm148 = vcmp.eq.s32.totalorder %v51, %v147
    %v149 = vsel %vm148, %v124, 0.0
    %150 = vadd.xlane.f32.xlu0 %v149
    %v151 = vpop.xlane.xlu0 %150
    %v152 = vsel %vm126, 1, 0
    %v153 = vcvt.s32.f32 %v152
    %154 = vadd.xlane.f32.xlu0 %v153
    %v155 = vpop.xlane.xlu0 %154
    %v156 = vld [vmem:[#allocation2] sm:$0xff]
    %vm157 = vcmp.gt.f32.partialorder %v131, %v156
    %v158 = vsel %vm157, %v131, %v156
    %vm159 = vcmask 7168
    %160 = vst.msk [vmem:[#allocation2] sm:$0xff] %vm159, %v158
    %v161 = vld [vmem:[#allocation3] sm:$0xff]
    %v162 = vsel %vm157, %v151, %v161
    %163 = vst.msk [vmem:[#allocation3] sm:$0xff] %vm159, %v162
    %v164 = vadd.s32 %v52, %v147
    %v165 = vcvt.s32.f32 %v164
    %v166 = vld [vmem:[#allocation4] sm:$0xff]
    %v167 = vsel %vm157, %v165, %v166
    %168 = vst.msk [vmem:[#allocation4] sm:$0xff] %vm159, %v167
    %v169 = vld [vmem:[#allocation5] sm:$0xff]
    %v170 = vadd.f32 %v169, %v155
    %171 = vst.msk [vmem:[#allocation5] sm:$0xff] %vm159, %v170
  $region21: #{_vpm_call.1} parent=0 // pred_fallthru
    _
  // Predicated region
  $region22: #{_vpm_call.1} parent=0 // pred_check
    %p172 = pneg %p33
  $region23: #{_vpm_call.1} parent=0 // pred_check_branch
    %174 = sbr.rel (%p172) target = $region25
  $region24: #{_vpm_call.1} parent=0 // pred_region
    %v175 = vld [vmem:[#allocation2] sm:$0xff]
    %177 = vset.pattern.permute.xlu0 0
    %178 = vperm.xlu0 %177, %v175
    %v179 = vpop.permute.xlu0 %178
    %181 = vst [vmem:[%s4] sm:$0xff] %v179
    %v182 = vld [vmem:[#allocation3] sm:$0xff]
    %v183 = vrsqrt.pop %v182
    %v184 = vmul.f32 %v183, %v182
    %v185 = vmul.f32 %v184, %v183
    %v186 = vmul.f32 0.5, %v185
    %v187 = vsub.f32 1.5, %v186
    %v188 = vmul.f32 %v183, %v187
    %v189 = vmul.f32 %v182, %v188
    %vm190 = vcmp.eq.f32.partialorder %v182, inf
    %v191 = vsel %vm190, %v182, %v189
    %vm192 = vcmp.eq.f32.partialorder %v182, 0.0
    %v193 = vand.u32 %v182, 2147483648
    %v194 = vsel %vm192, %v193, %v191
    %196 = vset.pattern.permute.xlu0 0
    %197 = vperm.xlu0 %196, %v194
    %v198 = vpop.permute.xlu0 %197
    %s200 = scalar_lea.vmem %s4, 8
    %201 = vst [vmem:[%s200] sm:$0xff] %v198
    %v202 = vld [vmem:[#allocation4] sm:$0xff]
    %204 = vset.pattern.permute.xlu0 0
    %205 = vperm.xlu0 %204, %v202
    %v206 = vpop.permute.xlu0 %205
    %s208 = scalar_lea.vmem %s4, 16
    %209 = vst [vmem:[%s208] sm:$0xff] %v206
    %v210 = vld [vmem:[#allocation5] sm:$0xff]
    %212 = vset.pattern.permute.xlu0 0
    %213 = vperm.xlu0 %212, %v210
    %v214 = vpop.permute.xlu0 %213
    %s216 = scalar_lea.vmem %s4, 24
    %217 = vst [vmem:[%s216] sm:$0xff] %v214
  $region25: #{_vpm_call.1} parent=0 // pred_fallthru
    _
  // Predicated region
  $region26: #{_vpm_call.1} parent=0 // pred_check
    _
  $region27: #{_vpm_call.1} parent=0 // pred_check_branch
    %219 = sbr.rel (0) target = $region29
  $region28: #{_vpm_call.1} parent=0 // pred_region
    _
  $region29: #{_vpm_call.1} parent=0 // pred_fallthru
    _
  // Predicated region
  $region30: #{_vpm_call.1} parent=0 // pred_check
    _
  $region31: #{_vpm_call.1} parent=0 // pred_check_branch
    %221 = sbr.rel (0) target = $region33
  $region32: #{_vpm_call.1} parent=0 // pred_region
    _
  $region33: #{_vpm_call.1} parent=0 // pred_fallthru
    _

</llo_original>
